<compile_context>
chip_gen: v5e
topology: v5e:2x2
jax: 0.10.0
libtpu: 0.0.40
codegen_flags: <defaults>
</compile_context>

<pallas_src>
import functools

import jax
import jax.numpy as jnp
from jax.experimental import pallas as pl
from jax.experimental.pallas import tpu as pltpu


def _round_up(v, m):
    return ((v + m - 1) // m) * m


def _mlp_kernel(num_layers, *refs):
    """Fused MLP hot path: all matmuls + bias + ReLU inside one kernel.

    refs = (x_ref, w0_ref, b0_ref, w1_ref, b1_ref, ..., o_ref)
    """
    x_ref = refs[0]
    o_ref = refs[-1]
    wb_refs = refs[1:-1]

    compute_dt = x_ref.dtype
    h = x_ref[...]                                   # native dtype into the MXU
    for i in range(num_layers):
        w = wb_refs[2 * i][...]
        b = wb_refs[2 * i + 1][...]                  # (1, out_dim) f32, broadcasts
        acc = jnp.dot(h, w, preferred_element_type=jnp.float32) + b
        if i < num_layers - 1:
            acc = jnp.maximum(acc, 0.0)              # ReLU on the f32 accumulator
            h = acc.astype(compute_dt)               # native dtype for next MXU pass
        else:
            h = acc
    # Last-layer weights are lane-padded in the wrapper, so this store is
    # full-lane / unmasked.
    o_ref[...] = h.astype(o_ref.dtype)


def mlp_forward(x, weights, biases, *, tile_m=512, compute_dtype=None):
    """Run the fused MLP Pallas kernel.

    x:        (..., input_dim)
    weights:  list of (in_dim_i, out_dim_i) arrays
    biases:   list of (out_dim_i,) arrays
    compute_dtype: optional dtype (e.g. jnp.bfloat16) for x / weights on the
                   MXU; accumulation stays f32, biases stay f32.
    """
    num_layers = len(weights)
    orig_lead = x.shape[:-1]
    in_dim = x.shape[-1]
    out_dim = weights[-1].shape[1]
    out_dtype = x.dtype

    if compute_dtype is None:
        compute_dtype = x.dtype

    # ---- lane-dense output: pad the LAST layer's columns to a 128 multiple.
    out_dim_p = _round_up(out_dim, 128)
    pad_n = out_dim_p - out_dim

    # Flatten all leading dims into a row axis. No padding of rows: Pallas
    # masks the ragged last block's read/writeback DMA.
    x2 = x.reshape(-1, in_dim).astype(compute_dtype)
    m = x2.shape[0]

    # ---- tile selection: big tiles, but guarantee >=2 grid steps for m > 128
    # so v7x's two TensorCores both get work via dimension_semantics.
    if m <= 128:
        tile_m_eff = m                               # single full-row block
        grid = (1,)
    else:
        half = _round_up(pl.cdiv(m, 2), 8)
        tile_m_eff = max(8, min(_round_up(tile_m, 8), half))
        grid = (pl.cdiv(m, tile_m_eff),)

    in_specs = [pl.BlockSpec((tile_m_eff, in_dim), lambda i: (i, 0))]
    args = [x2]
    flops = 0
    for li, (w, b) in enumerate(zip(weights, biases)):
        di, do = w.shape
        w = w.astype(compute_dtype)
        b = b.astype(jnp.float32)                    # pre-cast: no in-kernel cast
        if li == num_layers - 1 and pad_n:
            w = jnp.pad(w, ((0, 0), (0, pad_n)))
            b = jnp.pad(b, ((0, pad_n),))
            do = out_dim_p
        # Full-array blocks, constant block index across the grid -> params are
        # DMA'd once and stay resident in VMEM.
        in_specs.append(pl.BlockSpec((di, do), lambda i: (0, 0)))
        in_specs.append(pl.BlockSpec((1, do), lambda i: (0, 0)))
        args.append(w)
        args.append(b.reshape(1, do))
        flops += 2 * m * di * do

    c_item = jnp.dtype(compute_dtype).itemsize
    o_item = jnp.dtype(out_dtype).itemsize
    bytes_accessed = (
        m * in_dim * c_item
        + m * out_dim_p * o_item
        + sum(a.size * a.dtype.itemsize for a in args[1:])
    )

    # ---- VMEM budget (double-buffer factor applied exactly once), cap 48 MiB
    # so v7x's 64 MiB/TC keeps headroom for compiler scratch.
    act_bytes = 2 * tile_m_eff * in_dim * c_item + 2 * tile_m_eff * out_dim_p * o_item
    param_bytes = 2 * sum(a.size * a.dtype.itemsize for a in args[1:])
    max_width = max([in_dim, out_dim_p] + [w.shape[1] for w in weights])
    scratch_bytes = 2 * tile_m_eff * max_width * 4   # f32 intermediates
    vmem_needed = int(1.25 * (act_bytes + param_bytes + scratch_bytes))
    vmem_limit = None
    if vmem_needed > 32 * 1024 * 1024:
        vmem_limit = int(min(vmem_needed, 48 * 1024 * 1024))

    out_padded = pl.pallas_call(
        functools.partial(_mlp_kernel, num_layers),
        out_shape=jax.ShapeDtypeStruct((m, out_dim_p), out_dtype),
        grid_spec=pltpu.PrefetchScalarGridSpec(
            num_scalar_prefetch=0,
            grid=grid,
            in_specs=in_specs,
            out_specs=pl.BlockSpec((tile_m_eff, out_dim_p), lambda i: (i, 0)),
        ),
        compiler_params=pltpu.CompilerParams(
            dimension_semantics=("parallel",),
            vmem_limit_bytes=vmem_limit,
        ),
        cost_estimate=pl.CostEstimate(
            flops=flops, transcendentals=0, bytes_accessed=bytes_accessed
        ),
    )(*args)

    out = out_padded[:, :out_dim] if pad_n else out_padded
    return out.reshape(*orig_lead, out_dim)


def init_mlp_params(key, input_dim, hidden_dim, output_dim, num_layers):
    """Deterministic init mirroring nn.Linear default (uniform +/- 1/sqrt(fan_in))."""
    h = [hidden_dim] * (num_layers - 1)
    dims_in = [input_dim] + h
    dims_out = h + [output_dim]
    weights, biases = [], []
    for n, k_out in zip(dims_in, dims_out):
        key, kw, kb = jax.random.split(key, 3)
        bound = 1.0 / (n ** 0.5)
        # Stored as (in, out) == torch weight (out, in) transposed.
        weights.append(jax.random.uniform(kw, (n, k_out), jnp.float32, -bound, bound))
        biases.append(jax.random.uniform(kb, (k_out,), jnp.float32, -bound, bound))
    return weights, biases


def mlp_reference(x, weights, biases):
    """Pure-JAX reference matching the PyTorch forward."""
    num_layers = len(weights)
    for i, (w, b) in enumerate(zip(weights, biases)):
        x = x @ w + b
        if i < num_layers - 1:
            x = jnp.maximum(x, 0.0)
    return x


if __name__ == "__main__":
    # Small shapes consistent with DETR's bbox-head usage: (batch, queries, dim)
    input_dim, hidden_dim, output_dim, num_layers = 32, 32, 4, 3
    batch, seq = 2, 8

    key = jax.random.PRNGKey(0)
    key, kx = jax.random.split(key)
    x = jax.random.normal(kx, (batch, seq, input_dim), jnp.float32)

    weights, biases = init_mlp_params(key, input_dim, hidden_dim, output_dim, num_layers)

    # Case 1: tiny M (single full-row block, grid=1).
    out = jax.block_until_ready(mlp_forward(x, weights, biases))
    ref = mlp_reference(x, weights, biases)
    assert out.shape == (batch, seq, output_dim), out.shape
    assert jnp.allclose(out, ref, atol=1e-5, rtol=1e-5), "mismatch (small M)"

    # Case 2: m=400 with default tile_m -> tile is capped at ceil(m/2): grid=2
    # (exercises the 2-TensorCore split path on v7x, harmless elsewhere).
    key, kx2 = jax.random.split(key)
    x2 = jax.random.normal(kx2, (4, 100, input_dim), jnp.float32)   # m = 400
    out2 = jax.block_until_ready(mlp_forward(x2, weights, biases))
    ref2 = mlp_reference(x2, weights, biases)
    assert out2.shape == (4, 100, output_dim), out2.shape
    assert jnp.allclose(out2, ref2, atol=1e-5, rtol=1e-5), "mismatch (grid=2)"

    # Case 3: multi-block grid with a ragged last block (no padding of rows).
    out3 = jax.block_until_ready(mlp_forward(x2, weights, biases, tile_m=128))
    assert jnp.allclose(out3, ref2, atol=1e-5, rtol=1e-5), "mismatch (ragged M)"

    # Case 4: bf16 compute path (f32 accumulation), loose tolerance.
    out4 = jax.block_until_ready(
        mlp_forward(x2, weights, biases, compute_dtype=jnp.bfloat16)
    )
    assert out4.shape == (4, 100, output_dim), out4.shape
    assert jnp.allclose(out4, ref2, atol=5e-2, rtol=5e-2), "mismatch (bf16)"

    print("KERNEL_OK")
</pallas_src>

<mosaic_0001>
module attributes {stable_mosaic.version = 11 : i64} {
  func.func @_mlp_kernel(%arg0: i32, %arg1: memref<16x32xf32, #tpu.memory_space<vmem>>, %arg2: memref<32x32xf32, #tpu.memory_space<vmem>>, %arg3: memref<1x32xf32, #tpu.memory_space<vmem>>, %arg4: memref<32x32xf32, #tpu.memory_space<vmem>>, %arg5: memref<1x32xf32, #tpu.memory_space<vmem>>, %arg6: memref<32x128xf32, #tpu.memory_space<vmem>>, %arg7: memref<1x128xf32, #tpu.memory_space<vmem>>, %arg8: memref<16x128xf32, #tpu.memory_space<vmem>>) attributes {dimension_semantics = [#tpu.dimension_semantics<parallel>], iteration_bounds = array<i64: 1>, scalar_prefetch = 0 : i64, scratch_operands = 0 : i64, tpu.core_type = #tpu.core_type<tc>, window_params = [{transform_indices = @transform_0, window_bounds = array<i64: 16, 32>}, {pipeline_mode = #tpu.pipeline_mode<synchronous>, transform_indices = @transform_1, window_bounds = array<i64: 32, 32>}, {pipeline_mode = #tpu.pipeline_mode<synchronous>, transform_indices = @transform_2, window_bounds = array<i64: 1, 32>}, {pipeline_mode = #tpu.pipeline_mode<synchronous>, transform_indices = @transform_3, window_bounds = array<i64: 32, 32>}, {pipeline_mode = #tpu.pipeline_mode<synchronous>, transform_indices = @transform_4, window_bounds = array<i64: 1, 32>}, {pipeline_mode = #tpu.pipeline_mode<synchronous>, transform_indices = @transform_5, window_bounds = array<i64: 32, 128>}, {pipeline_mode = #tpu.pipeline_mode<synchronous>, transform_indices = @transform_6, window_bounds = array<i64: 1, 128>}, {transform_indices = @transform_7, window_bounds = array<i64: 16, 128>}]} {
    %c0 = arith.constant 0 : index
    %c0_0 = arith.constant 0 : index
    %0 = vector.load %arg1[%c0, %c0_0] : memref<16x32xf32, #tpu.memory_space<vmem>>, vector<16x32xf32>
    %c0_1 = arith.constant 0 : index
    %c0_2 = arith.constant 0 : index
    %1 = vector.load %arg2[%c0_1, %c0_2] : memref<32x32xf32, #tpu.memory_space<vmem>>, vector<32x32xf32>
    %c0_3 = arith.constant 0 : index
    %c0_4 = arith.constant 0 : index
    %2 = vector.load %arg3[%c0_3, %c0_4] : memref<1x32xf32, #tpu.memory_space<vmem>>, vector<1x32xf32>
    %cst = arith.constant dense<0.000000e+00> : vector<16x32xf32>
    %3 = tpu.matmul %0, %1, %cst {dimension_numbers = #tpu.dot_dimension_numbers<[1], [0], [0], [1], [0, 0, 1, 1], [], []>} : vector<16x32xf32>, vector<32x32xf32>, vector<16x32xf32> -> vector<16x32xf32>
    %4 = vector.broadcast %2 : vector<1x32xf32> to vector<16x32xf32>
    %5 = arith.addf %3, %4 : vector<16x32xf32>
    %cst_5 = arith.constant 0.000000e+00 : f32
    %6 = vector.broadcast %cst_5 : f32 to vector<16x32xf32>
    %7 = arith.maximumf %5, %6 : vector<16x32xf32>
    %c0_6 = arith.constant 0 : index
    %c0_7 = arith.constant 0 : index
    %8 = vector.load %arg4[%c0_6, %c0_7] : memref<32x32xf32, #tpu.memory_space<vmem>>, vector<32x32xf32>
    %c0_8 = arith.constant 0 : index
    %c0_9 = arith.constant 0 : index
    %9 = vector.load %arg5[%c0_8, %c0_9] : memref<1x32xf32, #tpu.memory_space<vmem>>, vector<1x32xf32>
    %cst_10 = arith.constant dense<0.000000e+00> : vector<16x32xf32>
    %10 = tpu.matmul %7, %8, %cst_10 {dimension_numbers = #tpu.dot_dimension_numbers<[1], [0], [0], [1], [0, 0, 1, 1], [], []>} : vector<16x32xf32>, vector<32x32xf32>, vector<16x32xf32> -> vector<16x32xf32>
    %11 = vector.broadcast %9 : vector<1x32xf32> to vector<16x32xf32>
    %12 = arith.addf %10, %11 : vector<16x32xf32>
    %cst_11 = arith.constant 0.000000e+00 : f32
    %13 = vector.broadcast %cst_11 : f32 to vector<16x32xf32>
    %14 = arith.maximumf %12, %13 : vector<16x32xf32>
    %c0_12 = arith.constant 0 : index
    %c0_13 = arith.constant 0 : index
    %15 = vector.load %arg6[%c0_12, %c0_13] : memref<32x128xf32, #tpu.memory_space<vmem>>, vector<32x128xf32>
    %c0_14 = arith.constant 0 : index
    %c0_15 = arith.constant 0 : index
    %16 = vector.load %arg7[%c0_14, %c0_15] : memref<1x128xf32, #tpu.memory_space<vmem>>, vector<1x128xf32>
    %cst_16 = arith.constant dense<0.000000e+00> : vector<16x128xf32>
    %17 = tpu.matmul %14, %15, %cst_16 {dimension_numbers = #tpu.dot_dimension_numbers<[1], [0], [0], [1], [0, 0, 1, 1], [], []>} : vector<16x32xf32>, vector<32x128xf32>, vector<16x128xf32> -> vector<16x128xf32>
    %18 = vector.broadcast %16 : vector<1x128xf32> to vector<16x128xf32>
    %19 = arith.addf %17, %18 : vector<16x128xf32>
    %c0_17 = arith.constant 0 : index
    %c0_18 = arith.constant 0 : index
    %20 = vector.load %arg8[%c0_17, %c0_18] : memref<16x128xf32, #tpu.memory_space<vmem>>, vector<16x128xf32>
    tpu.vector_store %arg8[%c0_17, %c0_18], %19 {strides = array<i32>} : memref<16x128xf32, #tpu.memory_space<vmem>>, vector<16x128xf32>,
    return
  }
  func.func @transform_0(%arg0: i32) -> (i32, i32) {
    %c0_i32 = arith.constant 0 : i32
    %c0_i32_0 = arith.constant 0 : i32
    return %arg0, %c0_i32 : i32, i32
  }
  func.func @transform_1(%arg0: i32) -> (i32, i32) {
    %c0_i32 = arith.constant 0 : i32
    %c0_i32_0 = arith.constant 0 : i32
    %c0_i32_1 = arith.constant 0 : i32
    return %c0_i32, %c0_i32_0 : i32, i32
  }
  func.func @transform_2(%arg0: i32) -> (i32, i32) {
    %c0_i32 = arith.constant 0 : i32
    %c0_i32_0 = arith.constant 0 : i32
    %c0_i32_1 = arith.constant 0 : i32
    return %c0_i32, %c0_i32_0 : i32, i32
  }
  func.func @transform_3(%arg0: i32) -> (i32, i32) {
    %c0_i32 = arith.constant 0 : i32
    %c0_i32_0 = arith.constant 0 : i32
    %c0_i32_1 = arith.constant 0 : i32
    return %c0_i32, %c0_i32_0 : i32, i32
  }
  func.func @transform_4(%arg0: i32) -> (i32, i32) {
    %c0_i32 = arith.constant 0 : i32
    %c0_i32_0 = arith.constant 0 : i32
    %c0_i32_1 = arith.constant 0 : i32
    return %c0_i32, %c0_i32_0 : i32, i32
  }
  func.func @transform_5(%arg0: i32) -> (i32, i32) {
    %c0_i32 = arith.constant 0 : i32
    %c0_i32_0 = arith.constant 0 : i32
    %c0_i32_1 = arith.constant 0 : i32
    return %c0_i32, %c0_i32_0 : i32, i32
  }
  func.func @transform_6(%arg0: i32) -> (i32, i32) {
    %c0_i32 = arith.constant 0 : i32
    %c0_i32_0 = arith.constant 0 : i32
    %c0_i32_1 = arith.constant 0 : i32
    return %c0_i32, %c0_i32_0 : i32, i32
  }
  func.func @transform_7(%arg0: i32) -> (i32, i32) {
    %c0_i32 = arith.constant 0 : i32
    %c0_i32_0 = arith.constant 0 : i32
    return %arg0, %c0_i32 : i32, i32
  }
}

</mosaic_0001>

<llo_original>
// kernel: tpu_custom_call.1
$region0: #{tpu_custom_call.1}
  #allocation0 [shape = 'u32[]', space=smem, size = 0x4, offset = 0x4, fixed_abs, tag = 'smem constant byte address 0x4 - core index']
  #allocation1 [shape = 'u32[72,128]{1,0:T(1,128)}', space=vmem, size = 0x9000, scoped, tag = 'internal scratch']
  %s0 = inlined_call_operand.hbm [shape: f32[16,32], index: 0, kind: input, shape index: {}]
  %s1 = inlined_call_operand.hbm [shape: f32[32,32], index: 1, kind: input, shape index: {}]
  %s2 = inlined_call_operand.vmem [shape: f32[1,32], index: 2, kind: input, shape index: {}]
  %s3 = inlined_call_operand.hbm [shape: f32[32,32], index: 3, kind: input, shape index: {}]
  %s4 = inlined_call_operand.vmem [shape: f32[1,32], index: 4, kind: input, shape index: {}]
  %s5 = inlined_call_operand.hbm [shape: f32[32,128], index: 5, kind: input, shape index: {}]
  %s6 = inlined_call_operand.vmem [shape: f32[1,128], index: 6, kind: input, shape index: {}]
  %s7 = inlined_call_operand.hbm [shape: f32[16,128], index: 7, kind: output, shape index: {}]
  %s8 = sld [smem:[#allocation0]]
  $region54: #{tpu_custom_call.1} parent=0
    _
  %s10 = ssub.s32 1, %s8
  %s11 = scalar_select 0, %s10, %s8
  $region1: #{tpu_custom_call.1} parent=0
    #allocation2 [shape = 'u8[8192]{0}', space=vmem, size = 0x2000, scoped, tag = 'input window, operand 0, single buffered']
    #allocation3 [shape = 's32[1]{0}', space=sflag, size = 0x4, scoped, tag = 'scoped memory for tpu_custom_call.1']
    #allocation4 [shape = 's32[1]{0}', space=sflag, size = 0x4, scoped, tag = 'scoped memory for tpu_custom_call.1']
    #allocation5 [shape = 'u8[16384]{0}', space=vmem, size = 0x4000, scoped, tag = 'input window, operand 1, single buffered']
    #allocation6 [shape = 's32[1]{0}', space=sflag, size = 0x4, scoped, tag = 'scoped memory for tpu_custom_call.1']
    #allocation7 [shape = 'u8[16384]{0}', space=vmem, size = 0x4000, scoped, tag = 'input window, operand 3, single buffered']
    #allocation8 [shape = 'u8[16384]{0}', space=vmem, size = 0x4000, scoped, tag = 'input window, operand 5, single buffered']
    #allocation9 [shape = 's32[1]{0}', space=sflag, size = 0x4, scoped, tag = 'scoped memory for tpu_custom_call.1']
    #allocation10 [shape = 'u8[8192]{0}', space=vmem, size = 0x2000, scoped, tag = 'output window, operand 0, single buffered']
    %12 = vsyncpa [#allocation3], 0
    %13 = vsyncpa [#allocation6], 0
    %14 = vsyncpa [#allocation9], 0
    %15 = vsyncpa [#allocation4], 0
    // Predicated region
    $region2: #{tpu_custom_call.1} parent=1 // pred_check
      _
    $region3: #{tpu_custom_call.1} parent=1 // pred_check_branch
      %17 = sbr.rel (0) target = $region5
    $region4: #{tpu_custom_call.1} parent=1 // pred_region
      %19 = vsyncadd [#allocation3], 0
      %s20 = sshll.u32 %s0, 4
      %s21 = int_to_ptr.hbm [resolvable:$true] %s20
      %s22 = sshll.u32 [#allocation2], 4
      %s23 = int_to_ptr.vmem [resolvable:$true] %s22
      %28 = dma.hbm_to_vmem [thread:$0]  %s21, 256, %s23, [#allocation3], 128, 128, 8
    $region5: #{tpu_custom_call.1} parent=1 // pred_fallthru
      _
    // Predicated region
    $region6: #{tpu_custom_call.1} parent=1 // pred_check
      _
    $region7: #{tpu_custom_call.1} parent=1 // pred_check_branch
      %30 = sbr.rel (0) target = $region9
    $region8: #{tpu_custom_call.1} parent=1 // pred_region
      %32 = vsyncadd [#allocation6], 0
      %s33 = sshll.u32 %s1, 4
      %s34 = int_to_ptr.hbm [resolvable:$true] %s33
      %s35 = sshll.u32 [#allocation5], 4
      %s36 = int_to_ptr.vmem [resolvable:$true] %s35
      %41 = dma.hbm_to_vmem [thread:$0]  %s34, 512, %s36, [#allocation6], 128, 128, 8
    $region9: #{tpu_custom_call.1} parent=1 // pred_fallthru
      _
    // Predicated region
    $region10: #{tpu_custom_call.1} parent=1 // pred_check
      _
    $region11: #{tpu_custom_call.1} parent=1 // pred_check_branch
      %43 = sbr.rel (0) target = $region13
    $region12: #{tpu_custom_call.1} parent=1 // pred_region
      _
    $region13: #{tpu_custom_call.1} parent=1 // pred_fallthru
      _
    // Predicated region
    $region14: #{tpu_custom_call.1} parent=1 // pred_check
      _
    $region15: #{tpu_custom_call.1} parent=1 // pred_check_branch
      %45 = sbr.rel (0) target = $region17
    $region16: #{tpu_custom_call.1} parent=1 // pred_region
      %47 = vsyncadd [#allocation6], 0
      %s48 = sshll.u32 %s3, 4
      %s49 = int_to_ptr.hbm [resolvable:$true] %s48
      %s50 = sshll.u32 [#allocation7], 4
      %s51 = int_to_ptr.vmem [resolvable:$true] %s50
      %56 = dma.hbm_to_vmem [thread:$0]  %s49, 512, %s51, [#allocation6], 128, 128, 8
    $region17: #{tpu_custom_call.1} parent=1 // pred_fallthru
      _
    // Predicated region
    $region18: #{tpu_custom_call.1} parent=1 // pred_check
      _
    $region19: #{tpu_custom_call.1} parent=1 // pred_check_branch
      %58 = sbr.rel (0) target = $region21
    $region20: #{tpu_custom_call.1} parent=1 // pred_region
      _
    $region21: #{tpu_custom_call.1} parent=1 // pred_fallthru
      _
    // Predicated region
    $region22: #{tpu_custom_call.1} parent=1 // pred_check
      _
    $region23: #{tpu_custom_call.1} parent=1 // pred_check_branch
      %60 = sbr.rel (0) target = $region25
    $region24: #{tpu_custom_call.1} parent=1 // pred_region
      %62 = vsyncadd [#allocation9], 0
      %s63 = sshll.u32 %s5, 4
      %s64 = int_to_ptr.hbm [resolvable:$true] %s63
      %s65 = sshll.u32 [#allocation8], 4
      %s66 = int_to_ptr.vmem [resolvable:$true] %s65
      %71 = dma.hbm_to_vmem [thread:$0]  %s64, 512, %s66, [#allocation9], 128, 128, 8
    $region25: #{tpu_custom_call.1} parent=1 // pred_fallthru
      _
    // Predicated region
    $region26: #{tpu_custom_call.1} parent=1 // pred_check
      _
    $region27: #{tpu_custom_call.1} parent=1 // pred_check_branch
      %73 = sbr.rel (0) target = $region29
    $region28: #{tpu_custom_call.1} parent=1 // pred_region
      _
    $region29: #{tpu_custom_call.1} parent=1 // pred_fallthru
      _
    // Predicated region
    $region30: #{tpu_custom_call.1} parent=1 // pred_check
      _
    $region31: #{tpu_custom_call.1} parent=1 // pred_check_branch
      %75 = sbr.rel (0) target = $region33
    $region32: #{tpu_custom_call.1} parent=1 // pred_region
      %77 = dma.done [#allocation3], 256
    $region33: #{tpu_custom_call.1} parent=1 // pred_fallthru
      _
    // Predicated region
    $region34: #{tpu_custom_call.1} parent=1 // pred_check
      _
    $region35: #{tpu_custom_call.1} parent=1 // pred_check_branch
      %79 = sbr.rel (0) target = $region37
    $region36: #{tpu_custom_call.1} parent=1 // pred_region
      %81 = dma.done [#allocation6], 512
    $region37: #{tpu_custom_call.1} parent=1 // pred_fallthru
      _
    // Predicated region
    $region38: #{tpu_custom_call.1} parent=1 // pred_check
      _
    $region39: #{tpu_custom_call.1} parent=1 // pred_check_branch
      %83 = sbr.rel (0) target = $region41
    $region40: #{tpu_custom_call.1} parent=1 // pred_region
      %85 = dma.done [#allocation6], 512
    $region41: #{tpu_custom_call.1} parent=1 // pred_fallthru
      _
    // Predicated region
    $region42: #{tpu_custom_call.1} parent=1 // pred_check
      _
    $region43: #{tpu_custom_call.1} parent=1 // pred_check_branch
      %87 = sbr.rel (0) target = $region45
    $region44: #{tpu_custom_call.1} parent=1 // pred_region
      %89 = dma.done [#allocation9], 512
    $region45: #{tpu_custom_call.1} parent=1 // pred_fallthru
      _
    %v90 = vld [vmem:[#allocation2] sm:$0xff]
    %v91 = vld [vmem:[#allocation2 + $0x8] sm:$0xff]
    %v92 = vld [vmem:[#allocation5] sm:$0xff]
    %v93 = vld [vmem:[#allocation5 + $0x8] sm:$0xff]
    %v94 = vld [vmem:[#allocation5 + $0x10] sm:$0xff]
    %v95 = vld [vmem:[#allocation5 + $0x18] sm:$0xff]
    %v96 = vld [vmem:[%s2] sm:$0x1]
    %v98 = vperm.slane %v96, 0
    %vm100 = vcmask 261120
    %v102 = vsel %vm100, %v90, 0
    %v105 = vsel %vm100, %v91, 0
    %107 = vmatpush.msra.mxu0 0.0
    %108 = vmatpush.msra.mxu0 0.0
    %109 = vmatpush.msra.mxu0 0.0
    %110 = vmatpush.msra.mxu0 0.0
    %111 = vmatpush.msra.mxu0 0.0
    %112 = vmatpush.msra.mxu0 0.0
    %113 = vmatpush.msra.mxu0 0.0
    %114 = vmatpush.msra.mxu0 0.0
    %115 = vmatpush.msra.mxu0 0.0
    %116 = vmatpush.msra.mxu0 0.0
    %117 = vmatpush.msra.mxu0 0.0
    %118 = vmatpush.msra.mxu0 0.0
    %119 = vmatpush.msra.mxu0 %v95
    %120 = vmatpush.msra.mxu0 %v94
    %121 = vmatpush.msra.mxu0 %v93
    %122 = vmatpush.msra.mxu0 %v92
    %123 = vmatmul.f32.gmra.mxu0 %v102
    %v124 = vpop.f32.mrf.mxu0
    %v125 = vadd.f32 %v98, %v124
    %126 = vmatmul.f32.gmra.mxu0 %v105
    %v127 = vpop.f32.mrf.mxu0
    %v128 = vadd.f32 %v98, %v127
    %129 = vdwg.mxu0
    %v130 = vmax.f32 %v125, 0.0
    %v131 = vmax.f32 %v128, 0.0
    %v132 = vld [vmem:[#allocation7] sm:$0xff]
    %v133 = vld [vmem:[#allocation7 + $0x8] sm:$0xff]
    %v134 = vld [vmem:[#allocation7 + $0x10] sm:$0xff]
    %v135 = vld [vmem:[#allocation7 + $0x18] sm:$0xff]
    %v136 = vld [vmem:[%s4] sm:$0x1]
    %v138 = vperm.slane %v136, 0
    %v141 = vsel %vm100, %v130, 0
    %v144 = vsel %vm100, %v131, 0
    %146 = vmatpush.msra.mxu0 0.0
    %147 = vmatpush.msra.mxu0 0.0
    %148 = vmatpush.msra.mxu0 0.0
    %149 = vmatpush.msra.mxu0 0.0
    %150 = vmatpush.msra.mxu0 0.0
    %151 = vmatpush.msra.mxu0 0.0
    %152 = vmatpush.msra.mxu0 0.0
    %153 = vmatpush.msra.mxu0 0.0
    %154 = vmatpush.msra.mxu0 0.0
    %155 = vmatpush.msra.mxu0 0.0
    %156 = vmatpush.msra.mxu0 0.0
    %157 = vmatpush.msra.mxu0 0.0
    %158 = vmatpush.msra.mxu0 %v135
    %159 = vmatpush.msra.mxu0 %v134
    %160 = vmatpush.msra.mxu0 %v133
    %161 = vmatpush.msra.mxu0 %v132
    %162 = vmatmul.f32.gmra.mxu0 %v141
    %v163 = vpop.f32.mrf.mxu0
    %v164 = vadd.f32 %v138, %v163
    %165 = vmatmul.f32.gmra.mxu0 %v144
    %v166 = vpop.f32.mrf.mxu0
    %v167 = vadd.f32 %v138, %v166
    %168 = vdwg.mxu0
    %v169 = vmax.f32 %v164, 0.0
    %v170 = vmax.f32 %v167, 0.0
    %v171 = vld [vmem:[#allocation8] sm:$0xff]
    %v172 = vld [vmem:[#allocation8 + $0x8] sm:$0xff]
    %v173 = vld [vmem:[#allocation8 + $0x10] sm:$0xff]
    %v174 = vld [vmem:[#allocation8 + $0x18] sm:$0xff]
    %v175 = vld [vmem:[%s6] sm:$0x1]
    %v177 = vperm.slane %v175, 0
    %v180 = vsel %vm100, %v169, 0
    %v183 = vsel %vm100, %v170, 0
    %185 = vmatpush.msra.mxu0 0.0
    %186 = vmatpush.msra.mxu0 0.0
    %187 = vmatpush.msra.mxu0 0.0
    %188 = vmatpush.msra.mxu0 0.0
    %189 = vmatpush.msra.mxu0 0.0
    %190 = vmatpush.msra.mxu0 0.0
    %191 = vmatpush.msra.mxu0 0.0
    %192 = vmatpush.msra.mxu0 0.0
    %193 = vmatpush.msra.mxu0 0.0
    %194 = vmatpush.msra.mxu0 0.0
    %195 = vmatpush.msra.mxu0 0.0
    %196 = vmatpush.msra.mxu0 0.0
    %197 = vmatpush.msra.mxu0 %v174
    %198 = vmatpush.msra.mxu0 %v173
    %199 = vmatpush.msra.mxu0 %v172
    %200 = vmatpush.msra.mxu0 %v171
    %201 = vmatmul.f32.gmra.mxu0 %v180
    %v202 = vpop.f32.mrf.mxu0
    %v203 = vadd.f32 %v177, %v202
    %204 = vmatmul.f32.gmra.mxu0 %v183
    %v205 = vpop.f32.mrf.mxu0
    %v206 = vadd.f32 %v177, %v205
    %207 = vdwg.mxu0
    %208 = vst [vmem:[#allocation10] sm:$0xff] %v203
    %209 = vst [vmem:[#allocation10 + $0x8] sm:$0xff] %v206
    // Predicated region
    $region46: #{tpu_custom_call.1} parent=1 // pred_check
      _
    $region47: #{tpu_custom_call.1} parent=1 // pred_check_branch
      %211 = sbr.rel (0) target = $region49
    $region48: #{tpu_custom_call.1} parent=1 // pred_region
      %213 = vsyncadd [#allocation4], 0
      %s214 = sshll.u32 [#allocation10], 4
      %s215 = int_to_ptr.vmem [resolvable:$true] %s214
      %s216 = sshll.u32 %s7, 4
      %s217 = int_to_ptr.hbm [resolvable:$true] %s216
      %222 = dma.vmem_to_hbm [thread:$0]  %s215, 256, %s217, [#allocation4], 128, 128, 8
    $region49: #{tpu_custom_call.1} parent=1 // pred_fallthru
      _
    // Predicated region
    $region50: #{tpu_custom_call.1} parent=1 // pred_check
      _
    $region51: #{tpu_custom_call.1} parent=1 // pred_check_branch
      %224 = sbr.rel (0) target = $region53
    $region52: #{tpu_custom_call.1} parent=1 // pred_region
      %226 = dma.done [#allocation4], 256
    $region53: #{tpu_custom_call.1} parent=1 // pred_fallthru
      _
    %227 = vsyncpa [#allocation3], 1
    %228 = vsyncpa [#allocation6], 1
    %229 = vsyncpa [#allocation9], 1
    %230 = vsyncpa [#allocation4], 1

</llo_original>
